<compile_context>
chip_gen: v5e
topology: v5e:2x2
jax: 0.10.0
libtpu: 0.0.40
codegen_flags: <defaults>
</compile_context>

<pallas_src>
import functools

import jax
import jax.numpy as jnp
from jax.experimental import pallas as pl
from jax.experimental.pallas import tpu as pltpu


def _decoder_kernel(x_ref, w1_ref, vec_ref, w2_ref, o_ref):
    """One (B, K) batch -> (B, E) output.  vec_ref rows: [gamma, beta, b2]."""
    # ---- Linear 1 (bias omitted: cancelled exactly by training-mode BN).
    x = x_ref[...].astype(w1_ref.dtype)            # activations cast in-kernel
    y1 = jnp.dot(x, w1_ref[...], preferred_element_type=jnp.float32)   # (B,E) f32

    # ---- BatchNorm1d (training mode, biased variance), centered form,
    #      folded affine, fused with ReLU.  All stats / VPU math in f32.
    mean = jnp.mean(y1, axis=0, keepdims=True)            # (1, E)
    centered = y1 - mean                                   # (B, E)
    var = jnp.mean(centered * centered, axis=0, keepdims=True)
    scale = vec_ref[0:1, :] * jax.lax.rsqrt(var + 1e-5)    # gamma * inv_std
    h = jnp.maximum(centered * scale + vec_ref[1:2, :], 0.0)   # BN + ReLU

    # ---- Linear 2
    h = h.astype(w2_ref.dtype)
    o_ref[...] = (jnp.dot(h, w2_ref[...], preferred_element_type=jnp.float32)
                  + vec_ref[2:3, :])                       # + b2


def _cost_estimate(n_batches, B, K, E, w_itemsize):
    flops = 2 * n_batches * B * (K * E + E * E)
    bytes_accessed = (n_batches * B * K * 4          # x
                      + K * E * w_itemsize           # w1 (fetched once)
                      + 3 * E * 4                    # stacked vectors
                      + E * E * w_itemsize           # w2 (fetched once)
                      + n_batches * B * E * 4)       # out
    return pl.CostEstimate(flops=flops, transcendentals=E,
                           bytes_accessed=bytes_accessed)


def prepare_params(params, matmul_dtype=jnp.bfloat16):
    """One-time param prep: persistent bf16 weights + stacked (3,E) vectors.

    Call once at init / param-load time, NOT per forward call, so there are no
    per-call convert ops.  matmul_dtype=jnp.bfloat16 is the default on every
    generation (single-pass MXU, halved weight DMA); BN math stays f32 either way.
    """
    w1, _b1_unused, gamma, beta, w2, b2 = params   # Linear1 bias is a BN no-op
    vecs = jnp.concatenate([gamma, beta, b2], axis=0).astype(jnp.float32)  # (3,E)
    return (w1.astype(matmul_dtype), vecs, w2.astype(matmul_dtype))


def simple_decoder_forward(x, prepped, emb_shape):
    """x: (B, h_size + s_size) float32.  Returns (B, C, H, W) float32."""
    w1, vecs, w2 = prepped
    B, K = x.shape
    E = w1.shape[1]
    vmem = pl.BlockSpec(memory_space=pltpu.MemorySpace.VMEM)

    out2d = pl.pallas_call(
        _decoder_kernel,
        out_shape=jax.ShapeDtypeStruct((B, E), jnp.float32),
        in_specs=[vmem, vmem, vmem, vmem],
        out_specs=vmem,
        cost_estimate=_cost_estimate(1, B, K, E, jnp.dtype(w1.dtype).itemsize),
    )(x, w1, vecs, w2)

    C, H, W = emb_shape
    return out2d.reshape(B, C, H, W)       # contiguous: metadata-only reshape


def simple_decoder_forward_candidates(xs, prepped, emb_shape):
    """Many independent candidate batches in one pallas_call.

    xs: (N, B, h_size + s_size) float32 -- N independent batches (e.g. PlaNet
    CEM candidates / horizon steps).  BatchNorm statistics are computed per
    candidate batch (axis 1 of size B), matching N separate module calls.
    Returns (N, B, C, H, W) float32.
    """
    w1, vecs, w2 = prepped
    N, B, K = xs.shape
    E = w1.shape[1]

    grid_spec = pltpu.PrefetchScalarGridSpec(
        num_scalar_prefetch=0,
        grid=(N,),
        in_specs=[
            pl.BlockSpec((None, B, K), lambda n: (n, 0, 0)),   # per-step x tile
            pl.BlockSpec((K, E), lambda n: (0, 0)),            # w1 VMEM-resident
            pl.BlockSpec((3, E), lambda n: (0, 0)),            # vecs resident
            pl.BlockSpec((E, E), lambda n: (0, 0)),            # w2 VMEM-resident
        ],
        out_specs=pl.BlockSpec((None, B, E), lambda n: (n, 0, 0)),
    )

    out = pl.pallas_call(
        _decoder_kernel,
        out_shape=jax.ShapeDtypeStruct((N, B, E), jnp.float32),
        grid_spec=grid_spec,
        compiler_params=pltpu.CompilerParams(
            dimension_semantics=("parallel",)),     # second TC on v7x
        cost_estimate=_cost_estimate(N, B, K, E, jnp.dtype(w1.dtype).itemsize),
    )(xs, w1, vecs, w2)

    C, H, W = emb_shape
    return out.reshape(N, B, C, H, W)


def init_params(key, in_dim, emb_size):
    """Deterministic synthetic parameters (shapes match the PyTorch module)."""
    k1, k2, k3, k4 = jax.random.split(key, 4)
    # Linear weights stored pre-transposed as (in, out) for row-major matmul.
    lim1 = 1.0 / jnp.sqrt(in_dim)
    lim2 = 1.0 / jnp.sqrt(emb_size)
    w1 = jax.random.uniform(k1, (in_dim, emb_size), jnp.float32, -lim1, lim1)
    b1 = jax.random.uniform(k2, (1, emb_size), jnp.float32, -lim1, lim1)
    w2 = jax.random.uniform(k3, (emb_size, emb_size), jnp.float32, -lim2, lim2)
    b2 = jax.random.uniform(k4, (1, emb_size), jnp.float32, -lim2, lim2)
    # BatchNorm1d affine params at their PyTorch init values.
    gamma = jnp.ones((1, emb_size), jnp.float32)
    beta = jnp.zeros((1, emb_size), jnp.float32)
    return (w1, b1, gamma, beta, w2, b2)


def reference_forward(x, params, emb_shape):
    """Pure-JAX reference faithful to the PyTorch module (includes Linear1 bias)."""
    w1, b1, gamma, beta, w2, b2 = params
    y1 = x @ w1 + b1
    mean = jnp.mean(y1, axis=0, keepdims=True)
    var = jnp.mean((y1 - mean) ** 2, axis=0, keepdims=True)
    y1n = (y1 - mean) * jax.lax.rsqrt(var + 1e-5) * gamma + beta
    h = jnp.maximum(y1n, 0.0)
    y2 = h @ w2 + b2
    B = x.shape[0]
    return y2.reshape(B, *emb_shape)


if __name__ == "__main__":
    # Small shapes consistent with the module.
    h_size, s_size = 16, 16            # belief / state vector sizes
    emb_shape = (4, 4, 8)              # (C, H, W) -> emb_size = 128
    obs_shape = (3, 32, 32)            # unused by forward()
    B = 16                             # per-candidate batch
    N = 4                              # independent candidate batches (grid demo)

    emb_size = emb_shape[0] * emb_shape[1] * emb_shape[2]
    in_dim = h_size + s_size

    key = jax.random.PRNGKey(0)
    kx, kxs, kp = jax.random.split(key, 3)
    x = jax.random.normal(kx, (B, in_dim), jnp.float32)      # h and s concatenated
    params = init_params(kp, in_dim, emb_size)

    # One-time param prep (persistent bf16 weights, stacked vectors).
    prepped_bf16 = prepare_params(params)                       # default: bf16 MXU
    prepped_f32 = prepare_params(params, matmul_dtype=jnp.float32)

    ref = reference_forward(x, params, emb_shape)

    # f32-matmul path: tight check that dropped bias + folded BN are exact.
    out_f32 = jax.block_until_ready(simple_decoder_forward(x, prepped_f32, emb_shape))
    assert out_f32.shape == (B, *emb_shape), out_f32.shape
    assert jnp.allclose(out_f32, ref, atol=2e-4, rtol=2e-4), "f32 mismatch vs reference"

    # Default bf16-MXU path (looser tolerance from bf16 operands).
    out_bf16 = jax.block_until_ready(simple_decoder_forward(x, prepped_bf16, emb_shape))
    assert out_bf16.shape == (B, *emb_shape), out_bf16.shape
    assert jnp.allclose(out_bf16, ref, atol=5e-2, rtol=5e-2), "bf16 mismatch vs reference"

    # Batched-candidates path: N independent batches, one pallas_call,
    # weights VMEM-resident across grid steps, per-batch BN statistics.
    xs = jax.random.normal(kxs, (N, B, in_dim), jnp.float32)
    refs = jax.vmap(lambda xb: reference_forward(xb, params, emb_shape))(xs)
    outs = jax.block_until_ready(
        simple_decoder_forward_candidates(xs, prepped_bf16, emb_shape))
    assert outs.shape == (N, B, *emb_shape), outs.shape
    assert jnp.allclose(outs, refs, atol=5e-2, rtol=5e-2), "batched mismatch vs reference"

    print("KERNEL_OK")
</pallas_src>

<mosaic_0001>
module attributes {stable_mosaic.version = 11 : i64} {
  func.func @_decoder_kernel(%arg0: memref<16x32xf32, #tpu.memory_space<vmem>>, %arg1: memref<32x128xf32, #tpu.memory_space<vmem>>, %arg2: memref<3x128xf32, #tpu.memory_space<vmem>>, %arg3: memref<128x128xf32, #tpu.memory_space<vmem>>, %arg4: memref<16x128xf32, #tpu.memory_space<vmem>>) attributes {dimension_semantics = [], scalar_prefetch = 0 : i64, scratch_operands = 0 : i64, tpu.core_type = #tpu.core_type<tc>} {
    %c0 = arith.constant 0 : index
    %c0_0 = arith.constant 0 : index
    %0 = vector.load %arg0[%c0, %c0_0] : memref<16x32xf32, #tpu.memory_space<vmem>>, vector<16x32xf32>
    %c0_1 = arith.constant 0 : index
    %c0_2 = arith.constant 0 : index
    %1 = vector.load %arg1[%c0_1, %c0_2] : memref<32x128xf32, #tpu.memory_space<vmem>>, vector<32x128xf32>
    %cst = arith.constant dense<0.000000e+00> : vector<16x128xf32>
    %2 = tpu.matmul %0, %1, %cst {dimension_numbers = #tpu.dot_dimension_numbers<[1], [0], [0], [1], [0, 0, 1, 1], [], []>} : vector<16x32xf32>, vector<32x128xf32>, vector<16x128xf32> -> vector<16x128xf32>
    %cst_3 = arith.constant dense<0.000000e+00> : vector<128xf32>
    %3 = vector.multi_reduction <add>, %2, %cst_3 [0] : vector<16x128xf32> to vector<128xf32>
    %4 = vector.shape_cast %3 : vector<128xf32> to vector<1x128xf32>
    %cst_4 = arith.constant 1.600000e+01 : f32
    %5 = vector.broadcast %cst_4 : f32 to vector<1x128xf32>
    %6 = arith.divf %4, %5 : vector<1x128xf32>
    %7 = vector.broadcast %6 : vector<1x128xf32> to vector<16x128xf32>
    %8 = arith.subf %2, %7 : vector<16x128xf32>
    %9 = arith.mulf %8, %8 : vector<16x128xf32>
    %cst_5 = arith.constant dense<0.000000e+00> : vector<128xf32>
    %10 = vector.multi_reduction <add>, %9, %cst_5 [0] : vector<16x128xf32> to vector<128xf32>
    %11 = vector.shape_cast %10 : vector<128xf32> to vector<1x128xf32>
    %cst_6 = arith.constant 1.600000e+01 : f32
    %12 = vector.broadcast %cst_6 : f32 to vector<1x128xf32>
    %13 = arith.divf %11, %12 : vector<1x128xf32>
    %c0_7 = arith.constant 0 : index
    %c0_8 = arith.constant 0 : index
    %14 = vector.load %arg2[%c0_7, %c0_8] : memref<3x128xf32, #tpu.memory_space<vmem>>, vector<1x128xf32>
    %cst_9 = arith.constant 9.99999974E-6 : f32
    %15 = vector.broadcast %cst_9 : f32 to vector<1x128xf32>
    %16 = arith.addf %13, %15 : vector<1x128xf32>
    %17 = math.rsqrt %16 : vector<1x128xf32>
    %18 = arith.mulf %14, %17 : vector<1x128xf32>
    %19 = vector.broadcast %18 : vector<1x128xf32> to vector<16x128xf32>
    %20 = arith.mulf %8, %19 : vector<16x128xf32>
    %c1 = arith.constant 1 : index
    %c0_10 = arith.constant 0 : index
    %21 = vector.load %arg2[%c1, %c0_10] : memref<3x128xf32, #tpu.memory_space<vmem>>, vector<1x128xf32>
    %22 = vector.broadcast %21 : vector<1x128xf32> to vector<16x128xf32>
    %23 = arith.addf %20, %22 : vector<16x128xf32>
    %cst_11 = arith.constant 0.000000e+00 : f32
    %24 = vector.broadcast %cst_11 : f32 to vector<16x128xf32>
    %25 = arith.maximumf %23, %24 : vector<16x128xf32>
    %c0_12 = arith.constant 0 : index
    %c0_13 = arith.constant 0 : index
    %26 = vector.load %arg3[%c0_12, %c0_13] : memref<128x128xf32, #tpu.memory_space<vmem>>, vector<128x128xf32>
    %cst_14 = arith.constant dense<0.000000e+00> : vector<16x128xf32>
    %27 = tpu.matmul %25, %26, %cst_14 {dimension_numbers = #tpu.dot_dimension_numbers<[1], [0], [0], [1], [0, 0, 1, 1], [], []>} : vector<16x128xf32>, vector<128x128xf32>, vector<16x128xf32> -> vector<16x128xf32>
    %c2 = arith.constant 2 : index
    %c0_15 = arith.constant 0 : index
    %28 = vector.load %arg2[%c2, %c0_15] : memref<3x128xf32, #tpu.memory_space<vmem>>, vector<1x128xf32>
    %29 = vector.broadcast %28 : vector<1x128xf32> to vector<16x128xf32>
    %30 = arith.addf %27, %29 : vector<16x128xf32>
    %c0_16 = arith.constant 0 : index
    %c0_17 = arith.constant 0 : index
    %31 = vector.load %arg4[%c0_16, %c0_17] : memref<16x128xf32, #tpu.memory_space<vmem>>, vector<16x128xf32>
    tpu.vector_store %arg4[%c0_16, %c0_17], %30 {strides = array<i32>} : memref<16x128xf32, #tpu.memory_space<vmem>>, vector<16x128xf32>,
    return
  }
}

</mosaic_0001>

<llo_original>
// kernel: tpu_custom_call.1
$region0: #{tpu_custom_call.1}
  #allocation0 [shape = 'u32[]', space=smem, size = 0x4, offset = 0x4, fixed_abs, tag = 'smem constant byte address 0x4 - core index']
  #allocation1 [shape = 'u32[72,128]{1,0:T(1,128)}', space=vmem, size = 0x9000, scoped, tag = 'internal scratch']
  %s0 = inlined_call_operand.hbm [shape: f32[16,32], index: 0, kind: input, shape index: {}]
  %s1 = inlined_call_operand.hbm [shape: f32[32,128], index: 1, kind: input, shape index: {}]
  %s2 = inlined_call_operand.hbm [shape: f32[3,128], index: 2, kind: input, shape index: {}]
  %s3 = inlined_call_operand.hbm [shape: f32[128,128], index: 3, kind: input, shape index: {}]
  %s4 = inlined_call_operand.hbm [shape: f32[16,128], index: 4, kind: output, shape index: {}]
  %s5 = sld [smem:[#allocation0]]
  $region42: #{tpu_custom_call.1} parent=0
    _
  %s7 = ssub.s32 1, %s5
  %s8 = scalar_select 0, %s7, %s5
  $region1: #{tpu_custom_call.1} parent=0
    #allocation2 [shape = 'u8[8192]{0}', space=vmem, size = 0x2000, scoped, tag = 'input window, operand 0, single buffered']
    #allocation3 [shape = 's32[1]{0}', space=sflag, size = 0x4, scoped, tag = 'scoped memory for tpu_custom_call.1']
    #allocation4 [shape = 's32[1]{0}', space=sflag, size = 0x4, scoped, tag = 'scoped memory for tpu_custom_call.1']
    #allocation5 [shape = 'u8[16384]{0}', space=vmem, size = 0x4000, scoped, tag = 'input window, operand 1, single buffered']
    #allocation6 [shape = 's32[1]{0}', space=sflag, size = 0x4, scoped, tag = 'scoped memory for tpu_custom_call.1']
    #allocation7 [shape = 'u8[2048]{0}', space=vmem, size = 0x800, scoped, tag = 'input window, operand 2, single buffered']
    #allocation8 [shape = 'u8[65536]{0}', space=vmem, size = 0x10000, scoped, tag = 'input window, operand 3, single buffered']
    #allocation9 [shape = 's32[1]{0}', space=sflag, size = 0x4, scoped, tag = 'scoped memory for tpu_custom_call.1']
    #allocation10 [shape = 'u8[8192]{0}', space=vmem, size = 0x2000, scoped, tag = 'output window, operand 0, single buffered']
    %9 = vsyncpa [#allocation3], 0
    %10 = vsyncpa [#allocation6], 0
    %11 = vsyncpa [#allocation9], 0
    %12 = vsyncpa [#allocation4], 0
    // Predicated region
    $region2: #{tpu_custom_call.1} parent=1 // pred_check
      _
    $region3: #{tpu_custom_call.1} parent=1 // pred_check_branch
      %14 = sbr.rel (0) target = $region5
    $region4: #{tpu_custom_call.1} parent=1 // pred_region
      %16 = vsyncadd [#allocation3], 0
      %s17 = sshll.u32 %s0, 4
      %s18 = int_to_ptr.hbm [resolvable:$true] %s17
      %s19 = sshll.u32 [#allocation2], 4
      %s20 = int_to_ptr.vmem [resolvable:$true] %s19
      %25 = dma.hbm_to_vmem [thread:$0]  %s18, 256, %s20, [#allocation3], 128, 128, 8
    $region5: #{tpu_custom_call.1} parent=1 // pred_fallthru
      _
    // Predicated region
    $region6: #{tpu_custom_call.1} parent=1 // pred_check
      _
    $region7: #{tpu_custom_call.1} parent=1 // pred_check_branch
      %27 = sbr.rel (0) target = $region9
    $region8: #{tpu_custom_call.1} parent=1 // pred_region
      %29 = vsyncadd [#allocation6], 0
      %s30 = sshll.u32 %s1, 4
      %s31 = int_to_ptr.hbm [resolvable:$true] %s30
      %s32 = sshll.u32 [#allocation5], 4
      %s33 = int_to_ptr.vmem [resolvable:$true] %s32
      %38 = dma.hbm_to_vmem [thread:$0]  %s31, 512, %s33, [#allocation6], 128, 128, 8
    $region9: #{tpu_custom_call.1} parent=1 // pred_fallthru
      _
    // Predicated region
    $region10: #{tpu_custom_call.1} parent=1 // pred_check
      _
    $region11: #{tpu_custom_call.1} parent=1 // pred_check_branch
      %40 = sbr.rel (0) target = $region13
    $region12: #{tpu_custom_call.1} parent=1 // pred_region
      %42 = vsyncadd [#allocation6], 0
      %s44 = sshll.u32 %s2, 4
      %s45 = int_to_ptr.hbm [resolvable:$true] %s44
      %s46 = sshll.u32 [#allocation7], 4
      %s47 = int_to_ptr.vmem [resolvable:$true] %s46
      %49 = dma.hbm_to_vmem [thread:$0]  %s45, 64, %s47, [#allocation6]
    $region13: #{tpu_custom_call.1} parent=1 // pred_fallthru
      _
    // Predicated region
    $region14: #{tpu_custom_call.1} parent=1 // pred_check
      _
    $region15: #{tpu_custom_call.1} parent=1 // pred_check_branch
      %51 = sbr.rel (0) target = $region17
    $region16: #{tpu_custom_call.1} parent=1 // pred_region
      %53 = vsyncadd [#allocation9], 0
      %s54 = sshll.u32 %s3, 4
      %s55 = int_to_ptr.hbm [resolvable:$true] %s54
      %s56 = sshll.u32 [#allocation8], 4
      %s57 = int_to_ptr.vmem [resolvable:$true] %s56
      %62 = dma.hbm_to_vmem [thread:$0]  %s55, 2048, %s57, [#allocation9], 128, 128, 8
    $region17: #{tpu_custom_call.1} parent=1 // pred_fallthru
      _
    // Predicated region
    $region18: #{tpu_custom_call.1} parent=1 // pred_check
      _
    $region19: #{tpu_custom_call.1} parent=1 // pred_check_branch
      %64 = sbr.rel (0) target = $region21
    $region20: #{tpu_custom_call.1} parent=1 // pred_region
      %66 = dma.done [#allocation3], 256
    $region21: #{tpu_custom_call.1} parent=1 // pred_fallthru
      _
    // Predicated region
    $region22: #{tpu_custom_call.1} parent=1 // pred_check
      _
    $region23: #{tpu_custom_call.1} parent=1 // pred_check_branch
      %68 = sbr.rel (0) target = $region25
    $region24: #{tpu_custom_call.1} parent=1 // pred_region
      %70 = dma.done [#allocation6], 512
    $region25: #{tpu_custom_call.1} parent=1 // pred_fallthru
      _
    // Predicated region
    $region26: #{tpu_custom_call.1} parent=1 // pred_check
      _
    $region27: #{tpu_custom_call.1} parent=1 // pred_check_branch
      %72 = sbr.rel (0) target = $region29
    $region28: #{tpu_custom_call.1} parent=1 // pred_region
      %74 = dma.done [#allocation6], 64
    $region29: #{tpu_custom_call.1} parent=1 // pred_fallthru
      _
    // Predicated region
    $region30: #{tpu_custom_call.1} parent=1 // pred_check
      _
    $region31: #{tpu_custom_call.1} parent=1 // pred_check_branch
      %76 = sbr.rel (0) target = $region33
    $region32: #{tpu_custom_call.1} parent=1 // pred_region
      %78 = dma.done [#allocation9], 2048
    $region33: #{tpu_custom_call.1} parent=1 // pred_fallthru
      _
    %v79 = vld [vmem:[#allocation2] sm:$0xff]
    %v80 = vld [vmem:[#allocation2 + $0x8] sm:$0xff]
    %v81 = vld [vmem:[#allocation5] sm:$0xff]
    %v82 = vld [vmem:[#allocation5 + $0x8] sm:$0xff]
    %v83 = vld [vmem:[#allocation5 + $0x10] sm:$0xff]
    %v84 = vld [vmem:[#allocation5 + $0x18] sm:$0xff]
    %vm85 = vcmask 261120
    %v87 = vsel %vm85, %v79, 0
    %v90 = vsel %vm85, %v80, 0
    %92 = vmatpush.msra.mxu0 0.0
    %93 = vmatpush.msra.mxu0 0.0
    %94 = vmatpush.msra.mxu0 0.0
    %95 = vmatpush.msra.mxu0 0.0
    %96 = vmatpush.msra.mxu0 0.0
    %97 = vmatpush.msra.mxu0 0.0
    %98 = vmatpush.msra.mxu0 0.0
    %99 = vmatpush.msra.mxu0 0.0
    %100 = vmatpush.msra.mxu0 0.0
    %101 = vmatpush.msra.mxu0 0.0
    %102 = vmatpush.msra.mxu0 0.0
    %103 = vmatpush.msra.mxu0 0.0
    %104 = vmatpush.msra.mxu0 %v84
    %105 = vmatpush.msra.mxu0 %v83
    %106 = vmatpush.msra.mxu0 %v82
    %107 = vmatpush.msra.mxu0 %v81
    %108 = vmatmul.f32.gmra.mxu0 %v87
    %v109 = vpop.f32.mrf.mxu0
    %v110 = vadd.f32 0.0, %v109
    %111 = vmatmul.f32.gmra.mxu0 %v90
    %v112 = vpop.f32.mrf.mxu0
    %v113 = vadd.f32 0.0, %v112
    %114 = vdwg.mxu0
    %v115 = vadd.f32 %v110, %v113
    %v116 = vrot.slane %v115, 4
    %v117 = vadd.f32 %v115, %v116
    %v118 = vrot.slane %v117, 2
    %v119 = vadd.f32 %v117, %v118
    %v120 = vrot.slane %v119, 1
    %v121 = vadd.f32 %v119, %v120
    %v122 = vrcp.pop 16.0
    %v123 = vmul.f32 16.0, %v122
    %v124 = vsub.f32 1.0, %v123
    %v125 = vmul.f32 %v122, %v124
    %v126 = vadd.f32 %v122, %v125
    %vm127 = vweird.f32 %v122
    %v128 = vsel %vm127, %v122, %v126
    %v129 = vmul.f32 %v121, %v128
    %v130 = vsub.f32 %v110, %v129
    %v131 = vsub.f32 %v113, %v129
    %v132 = vmul.f32 %v130, %v130
    %v133 = vmul.f32 %v131, %v131
    %v134 = vadd.f32 %v132, %v133
    %v135 = vrot.slane %v134, 4
    %v136 = vadd.f32 %v134, %v135
    %v137 = vrot.slane %v136, 2
    %v138 = vadd.f32 %v136, %v137
    %v139 = vrot.slane %v138, 1
    %v140 = vadd.f32 %v138, %v139
    %v141 = vmul.f32 %v140, %v128
    %v142 = vld [vmem:[#allocation7] sm:$0x1]
    %v143 = vadd.f32 %v141, 1e-05
    %v144 = vrsqrt.pop %v143
    %v145 = vmul.f32 %v144, %v143
    %v146 = vmul.f32 %v145, %v144
    %v147 = vmul.f32 0.5, %v146
    %v148 = vsub.f32 1.5, %v147
    %v149 = vmul.f32 %v144, %v148
    %vm150 = vweird.f32 %v143
    %vm151 = vweird.f32 %v144
    %vm152 = vmor %vm150, %vm151
    %v153 = vsel %vm152, %v144, %v149
    %v154 = vmul.f32 %v142, %v153
    %v155 = vperm.slane %v154, 0
    %v156 = vmul.f32 %v130, %v155
    %v157 = vmul.f32 %v131, %v155
    %v158 = vld [vmem:[#allocation7 + $0x1] sm:$0x1]
    %v159 = vperm.slane %v158, 0
    %v160 = vadd.f32 %v156, %v159
    %v161 = vadd.f32 %v157, %v159
    %v162 = vmax.f32 %v160, 0.0
    %v163 = vmax.f32 %v161, 0.0
    %v164 = vld [vmem:[#allocation8] sm:$0xff]
    %v165 = vld [vmem:[#allocation8 + $0x8] sm:$0xff]
    %v166 = vld [vmem:[#allocation8 + $0x10] sm:$0xff]
    %v167 = vld [vmem:[#allocation8 + $0x18] sm:$0xff]
    %v168 = vld [vmem:[#allocation8 + $0x20] sm:$0xff]
    %v169 = vld [vmem:[#allocation8 + $0x28] sm:$0xff]
    %v170 = vld [vmem:[#allocation8 + $0x30] sm:$0xff]
    %v171 = vld [vmem:[#allocation8 + $0x38] sm:$0xff]
    %v172 = vld [vmem:[#allocation8 + $0x40] sm:$0xff]
    %v173 = vld [vmem:[#allocation8 + $0x48] sm:$0xff]
    %v174 = vld [vmem:[#allocation8 + $0x50] sm:$0xff]
    %v175 = vld [vmem:[#allocation8 + $0x58] sm:$0xff]
    %v176 = vld [vmem:[#allocation8 + $0x60] sm:$0xff]
    %v177 = vld [vmem:[#allocation8 + $0x68] sm:$0xff]
    %v178 = vld [vmem:[#allocation8 + $0x70] sm:$0xff]
    %v179 = vld [vmem:[#allocation8 + $0x78] sm:$0xff]
    %v180 = vld [vmem:[#allocation7 + $0x2] sm:$0x1]
    %v181 = vperm.slane %v180, 0
    %182 = vmatpush.msra.mxu0 %v179
    %183 = vmatpush.msra.mxu0 %v178
    %184 = vmatpush.msra.mxu0 %v177
    %185 = vmatpush.msra.mxu0 %v176
    %186 = vmatpush.msra.mxu0 %v175
    %187 = vmatpush.msra.mxu0 %v174
    %188 = vmatpush.msra.mxu0 %v173
    %189 = vmatpush.msra.mxu0 %v172
    %190 = vmatpush.msra.mxu0 %v171
    %191 = vmatpush.msra.mxu0 %v170
    %192 = vmatpush.msra.mxu0 %v169
    %193 = vmatpush.msra.mxu0 %v168
    %194 = vmatpush.msra.mxu0 %v167
    %195 = vmatpush.msra.mxu0 %v166
    %196 = vmatpush.msra.mxu0 %v165
    %197 = vmatpush.msra.mxu0 %v164
    %198 = vmatmul.f32.gmra.mxu0 %v162
    %v199 = vpop.f32.mrf.mxu0
    %v200 = vadd.f32 %v181, %v199
    %201 = vmatmul.f32.gmra.mxu0 %v163
    %v202 = vpop.f32.mrf.mxu0
    %v203 = vadd.f32 %v181, %v202
    %204 = vdwg.mxu0
    %205 = vst [vmem:[#allocation10] sm:$0xff] %v200
    %206 = vst [vmem:[#allocation10 + $0x8] sm:$0xff] %v203
    // Predicated region
    $region34: #{tpu_custom_call.1} parent=1 // pred_check
      _
    $region35: #{tpu_custom_call.1} parent=1 // pred_check_branch
      %208 = sbr.rel (0) target = $region37
    $region36: #{tpu_custom_call.1} parent=1 // pred_region
      %210 = vsyncadd [#allocation4], 0
      %s211 = sshll.u32 [#allocation10], 4
      %s212 = int_to_ptr.vmem [resolvable:$true] %s211
      %s213 = sshll.u32 %s4, 4
      %s214 = int_to_ptr.hbm [resolvable:$true] %s213
      %219 = dma.vmem_to_hbm [thread:$0]  %s212, 256, %s214, [#allocation4], 128, 128, 8
    $region37: #{tpu_custom_call.1} parent=1 // pred_fallthru
      _
    // Predicated region
    $region38: #{tpu_custom_call.1} parent=1 // pred_check
      _
    $region39: #{tpu_custom_call.1} parent=1 // pred_check_branch
      %221 = sbr.rel (0) target = $region41
    $region40: #{tpu_custom_call.1} parent=1 // pred_region
      %223 = dma.done [#allocation4], 256
    $region41: #{tpu_custom_call.1} parent=1 // pred_fallthru
      _
    %224 = vsyncpa [#allocation3], 1
    %225 = vsyncpa [#allocation6], 1
    %226 = vsyncpa [#allocation9], 1
    %227 = vsyncpa [#allocation4], 1

</llo_original>
